<compile_context>
chip_gen: v6e
topology: v6e:2x2x1
jax: 0.10.0
libtpu: 0.0.40
codegen_flags: <defaults>
</compile_context>

<pallas_src>
import jax
import jax.numpy as jnp
from jax.experimental import pallas as pl
from jax.experimental.pallas import tpu as pltpu

BN_EPS = 1e-5
NEG_SLOPE = 0.1
LANE = 128


def _round_up(x, m):
    return (x + m - 1) // m * m


def _cdiv(a, b):
    return (a + b - 1) // b


def _tpu_vmem_capacity():
    try:
        return int(pltpu.get_tpu_info().vmem_capacity_bytes)
    except Exception:
        return 64 << 20  # conservative (v7x-sized) fallback


def _default_vmem_limit(cap):
    # ~3/4 of physical VMEM: 96 MiB on v5e/v6e (128 MiB phys), 48 MiB on v7x (64 MiB).
    return max(32 << 20, min((cap * 3) // 4, 96 << 20))


def _default_tile_m(cap):
    return 1024 if cap >= (100 << 20) else 512


# ---------------------------------------------------------------------------
# Kernels
# ---------------------------------------------------------------------------
def _conv_stats_kernel(patches_ref, w_ref, conv_ref, stats_ref, acc_ref):
    """Large-K path, pass 1: K-tiled matmul (bf16 in, f32 acc) + partial BN sums."""
    k = pl.program_id(1)

    @pl.when(k == 0)
    def _():
        acc_ref[...] = jnp.zeros_like(acc_ref)

    acc_ref[...] += jnp.dot(patches_ref[...], w_ref[...],
                            preferred_element_type=jnp.float32)

    @pl.when(k == pl.num_programs(1) - 1)
    def _():
        acc = acc_ref[...]                               # [TM, Cpad] f32
        conv_ref[...] = acc.astype(conv_ref.dtype)       # bf16 carry between passes
        # Per-tile partial per-channel sum (row 0) / sum of squares (row 1).
        # Zero-padded rows contribute exactly 0 to both.
        # TODO(synk): switch to centered (count/mean/M2) partials if BN-stat
        # cancellation ever matters for very large M.
        stats_ref[...] = jnp.zeros_like(stats_ref)
        stats_ref[0:1, :] = jnp.sum(acc, axis=0, keepdims=True)
        stats_ref[1:2, :] = jnp.sum(acc * acc, axis=0, keepdims=True)


def _stats_only_kernel(patches_ref, w_ref, stats_ref):
    """Small-K path, pass 1: BN partial sums only (conv never hits HBM)."""
    conv = jnp.dot(patches_ref[...], w_ref[...], preferred_element_type=jnp.float32)
    stats_ref[...] = jnp.zeros_like(stats_ref)
    stats_ref[0:1, :] = jnp.sum(conv, axis=0, keepdims=True)
    stats_ref[1:2, :] = jnp.sum(conv * conv, axis=0, keepdims=True)


def _fused_conv_bn_act_kernel(patches_ref, w_ref, scale_ref, shift_ref, out_ref):
    """Small-K path, pass 2: matmul + BN affine + LeakyReLU, final output only."""
    conv = jnp.dot(patches_ref[...], w_ref[...], preferred_element_type=jnp.float32)
    y = conv * scale_ref[...] + shift_ref[...]
    out_ref[...] = jnp.where(y >= 0, y, NEG_SLOPE * y).astype(out_ref.dtype)


def _bn_act_kernel(conv_ref, scale_ref, shift_ref, out_ref):
    """Large-K path, pass 2: BN affine + LeakyReLU over the bf16 conv intermediate."""
    y = conv_ref[...].astype(jnp.float32) * scale_ref[...] + shift_ref[...]
    out_ref[...] = jnp.where(y >= 0, y, NEG_SLOPE * y).astype(out_ref.dtype)


# ---------------------------------------------------------------------------
# Host-side glue
# ---------------------------------------------------------------------------
def _im2col_bf16(x_nchw, kernel, stride, padding):
    """Extract conv patches in bf16, K ordered (cin, kh, kw) to match PyTorch weights."""
    N, C, H, W = x_nchw.shape
    kh = kw = kernel
    xp = jnp.pad(x_nchw.astype(jnp.bfloat16),
                 ((0, 0), (0, 0), (padding, padding), (padding, padding)))
    Hp, Wp = H + 2 * padding, W + 2 * padding
    OH = (Hp - kh) // stride + 1
    OW = (Wp - kw) // stride + 1
    cols = []
    for i in range(kh):
        for j in range(kw):
            cols.append(xp[:, :, i:i + stride * OH:stride, j:j + stride * OW:stride])
    p = jnp.stack(cols, axis=0).reshape(kh, kw, N, C, OH, OW)
    p = p.transpose(2, 4, 5, 3, 0, 1)                 # [N, OH, OW, C, kh, kw]
    patches = p.reshape(N * OH * OW, C * kh * kw)     # [M, K] bf16
    return patches, OH, OW


def _bn_scale_shift(stats, M, Cpad, Cout, gamma, beta):
    """Tiny host-side reduction of per-tile partial sums -> per-channel scale/shift."""
    num_tiles = stats.shape[0] // 8
    stats = stats.reshape(num_tiles, 8, Cpad)
    ch_sum = jnp.sum(stats[:, 0, :], axis=0)                      # [Cpad]
    ch_sumsq = jnp.sum(stats[:, 1, :], axis=0)                    # [Cpad]
    m = jnp.float32(M)                                            # true element count
    mean = ch_sum / m
    var = jnp.maximum(ch_sumsq / m - mean * mean, 0.0)            # biased batch variance
    inv_std = jax.lax.rsqrt(var + BN_EPS)
    gamma_p = jnp.zeros((Cpad,), jnp.float32).at[:Cout].set(gamma.astype(jnp.float32))
    beta_p = jnp.zeros((Cpad,), jnp.float32).at[:Cout].set(beta.astype(jnp.float32))
    scale = (gamma_p * inv_std).reshape(1, Cpad)
    shift = (beta_p - mean * gamma_p * inv_std).reshape(1, Cpad)
    return scale, shift


def cnn_block_forward(x_nchw, weight, gamma, beta, *, kernel, stride, padding,
                      tile_m=None, tile_k=512, out_dtype=jnp.float32,
                      output_nhwc=False):
    N, Cin, H, W = x_nchw.shape
    Cout = weight.shape[0]

    vmem_cap = _tpu_vmem_capacity()
    vmem_limit = _default_vmem_limit(vmem_cap)
    if tile_m is None:
        tile_m = _default_tile_m(vmem_cap)

    patches, OH, OW = _im2col_bf16(x_nchw, kernel, stride, padding)   # [M, K] bf16
    M, K = patches.shape
    Cpad = _round_up(Cout, LANE)

    # bf16 min tile is (16, 128): force TM to a multiple of 16.
    TM = max(16, _round_up(min(tile_m, _round_up(M, 16)), 16))
    Mpad = _round_up(M, TM)
    num_tiles = Mpad // TM
    # TODO(synk): on v7x (2 TensorCores) prefer an even num_tiles >= 2 so the "parallel"
    # M axis shards across both cores.

    w2d = weight.reshape(Cout, K).T.astype(jnp.bfloat16)              # [K, Cout] bf16
    out_bytes = jnp.dtype(out_dtype).itemsize

    # Small-K layers: rereading the patches is cheaper than a conv HBM round trip.
    fuse_small_k = K < 2 * Cpad
    if fuse_small_k:
        Kpad, TK, num_k = K, K, 1                  # full-extent (un-tiled) K block
    else:
        num_k = _cdiv(_round_up(K, LANE), tile_k)
        TK = _round_up(_cdiv(K, num_k), LANE)      # lane/sublane-friendly K tile
        Kpad = num_k * TK

    # Zero padding contributes exactly 0 to conv and stats.  Single producer in bf16.
    patches_p = jnp.pad(patches, ((0, Mpad - M), (0, Kpad - K)))
    w_p = jnp.pad(w2d, ((0, Kpad - K), (0, Cpad - Cout)))

    stats_shape = jax.ShapeDtypeStruct((8 * num_tiles, Cpad), jnp.float32)

    if fuse_small_k:
        # ---- Pass 1: BN partial stats only (no conv intermediate) ------------
        stats = pl.pallas_call(
            _stats_only_kernel,
            grid=(num_tiles,),
            in_specs=[
                pl.BlockSpec((TM, Kpad), lambda i: (i, 0)),
                pl.BlockSpec((Kpad, Cpad), lambda i: (0, 0)),
            ],
            out_specs=pl.BlockSpec((8, Cpad), lambda i: (i, 0)),
            out_shape=stats_shape,
            compiler_params=pltpu.CompilerParams(
                dimension_semantics=("parallel",),
                vmem_limit_bytes=vmem_limit,
            ),
            cost_estimate=pl.CostEstimate(
                flops=2 * Mpad * Kpad * Cpad, transcendentals=0,
                bytes_accessed=Mpad * Kpad * 2 + Kpad * Cpad * 2
                + 8 * num_tiles * Cpad * 4,
            ),
        )(patches_p, w_p)

        scale, shift = _bn_scale_shift(stats, M, Cpad, Cout, gamma, beta)

        # ---- Pass 2: fused matmul + BN affine + LeakyReLU (lane-dense stores) --
        out_flat = pl.pallas_call(
            _fused_conv_bn_act_kernel,
            grid=(num_tiles,),
            in_specs=[
                pl.BlockSpec((TM, Kpad), lambda i: (i, 0)),
                pl.BlockSpec((Kpad, Cpad), lambda i: (0, 0)),
                pl.BlockSpec((1, Cpad), lambda i: (0, 0)),
                pl.BlockSpec((1, Cpad), lambda i: (0, 0)),
            ],
            out_specs=pl.BlockSpec((TM, Cpad), lambda i: (i, 0)),
            out_shape=jax.ShapeDtypeStruct((Mpad, Cpad), out_dtype),
            compiler_params=pltpu.CompilerParams(
                dimension_semantics=("parallel",),
                vmem_limit_bytes=vmem_limit,
            ),
            cost_estimate=pl.CostEstimate(
                flops=2 * Mpad * Kpad * Cpad, transcendentals=0,
                bytes_accessed=Mpad * Kpad * 2 + Kpad * Cpad * 2
                + 2 * Cpad * 4 + Mpad * Cpad * out_bytes,
            ),
        )(patches_p, w_p, scale, shift)
    else:
        # ---- Pass 1: K-tiled conv matmul (bf16 carry) + partial stats ---------
        conv, stats = pl.pallas_call(
            _conv_stats_kernel,
            grid=(num_tiles, num_k),
            in_specs=[
                pl.BlockSpec((TM, TK), lambda i, k: (i, k)),
                pl.BlockSpec((TK, Cpad), lambda i, k: (k, 0)),
            ],
            out_specs=[
                pl.BlockSpec((TM, Cpad), lambda i, k: (i, 0)),
                pl.BlockSpec((8, Cpad), lambda i, k: (i, 0)),
            ],
            out_shape=[
                jax.ShapeDtypeStruct((Mpad, Cpad), jnp.bfloat16),
                stats_shape,
            ],
            scratch_shapes=[pltpu.VMEM((TM, Cpad), jnp.float32)],
            compiler_params=pltpu.CompilerParams(
                dimension_semantics=("parallel", "arbitrary"),
                vmem_limit_bytes=vmem_limit,
            ),
            cost_estimate=pl.CostEstimate(
                flops=2 * Mpad * Kpad * Cpad, transcendentals=0,
                bytes_accessed=Mpad * Kpad * 2 + Kpad * Cpad * 2
                + Mpad * Cpad * 2 + 8 * num_tiles * Cpad * 4,
            ),
        )(patches_p, w_p)

        scale, shift = _bn_scale_shift(stats, M, Cpad, Cout, gamma, beta)

        # ---- Pass 2: BN affine + LeakyReLU over the bf16 conv intermediate -----
        out_flat = pl.pallas_call(
            _bn_act_kernel,
            grid=(num_tiles,),
            in_specs=[
                pl.BlockSpec((TM, Cpad), lambda i: (i, 0)),
                pl.BlockSpec((1, Cpad), lambda i: (0, 0)),
                pl.BlockSpec((1, Cpad), lambda i: (0, 0)),
            ],
            out_specs=pl.BlockSpec((TM, Cpad), lambda i: (i, 0)),
            out_shape=jax.ShapeDtypeStruct((Mpad, Cpad), out_dtype),
            compiler_params=pltpu.CompilerParams(
                dimension_semantics=("parallel",),
                vmem_limit_bytes=vmem_limit,
            ),
            cost_estimate=pl.CostEstimate(
                flops=2 * Mpad * Cpad, transcendentals=0,
                bytes_accessed=Mpad * Cpad * 2 + 2 * Cpad * 4
                + Mpad * Cpad * out_bytes,
            ),
        )(conv, scale, shift)

    # [Mpad, Cpad] -> [M, Cout] -> [N, OH, OW, Cout] (-> NCHW unless the consumer
    # accepts NHWC, in which case the transpose is skipped).
    out = out_flat[:M, :Cout].reshape(N, OH, OW, Cout)
    if output_nhwc:
        return out
    return out.transpose(0, 3, 1, 2)


def _reference(x_nchw, weight, gamma, beta, *, kernel, stride, padding):
    """Pure-JAX f32 reference matching the PyTorch module (train-mode BN)."""
    conv = jax.lax.conv_general_dilated(
        x_nchw, weight,
        window_strides=(stride, stride),
        padding=[(padding, padding), (padding, padding)],
        dimension_numbers=("NCHW", "OIHW", "NCHW"),
    )
    mean = jnp.mean(conv, axis=(0, 2, 3), keepdims=True)
    var = jnp.mean((conv - mean) ** 2, axis=(0, 2, 3), keepdims=True)
    y = (conv - mean) * jax.lax.rsqrt(var + BN_EPS)
    y = y * gamma.reshape(1, -1, 1, 1) + beta.reshape(1, -1, 1, 1)
    return jnp.where(y >= 0, y, NEG_SLOPE * y)


if __name__ == "__main__":
    def run_case(name, N, Cin, H, W, Cout, kernel, stride, padding, tile_m, key, atol):
        kx, kw_, kg, kb = jax.random.split(key, 4)
        x = jax.random.normal(kx, (N, Cin, H, W), dtype=jnp.float32)
        weight = 0.1 * jax.random.normal(kw_, (Cout, Cin, kernel, kernel),
                                         dtype=jnp.float32)
        gamma = 1.0 + 0.1 * jax.random.normal(kg, (Cout,), dtype=jnp.float32)
        beta = 0.05 * jax.random.normal(kb, (Cout,), dtype=jnp.float32)

        out = cnn_block_forward(x, weight, gamma, beta, kernel=kernel,
                                stride=stride, padding=padding, tile_m=tile_m)
        out = jax.block_until_ready(out)

        ref = _reference(x, weight, gamma, beta,
                         kernel=kernel, stride=stride, padding=padding)
        OH = (H + 2 * padding - kernel) // stride + 1
        OW = (W + 2 * padding - kernel) // stride + 1
        assert out.shape == (N, Cout, OH, OW), (name, out.shape)
        # bf16 MXU operands / bf16 conv carry (f32 accumulate) -> loose tolerance vs
        # the f32 reference.
        err = float(jnp.max(jnp.abs(out - ref)))
        assert jnp.allclose(out, ref, rtol=5e-2, atol=atol), (name, err)

    key = jax.random.PRNGKey(0)
    k1, k2 = jax.random.split(key)

    # CNNBlock(4, 8, kernel=3, stride=1, padding=1): K=36 < 2*Cpad -> small-K fused
    # path; tile_m=128 -> 4 M-tiles so the multi-tile partial-stats path is exercised.
    run_case("fused_small_k", 2, 4, 16, 16, 8, 3, 1, 1, 128, k1, atol=5e-2)

    # Larger Cin: K=576 >= 2*Cpad -> K-tiled conv+stats path (2 K tiles, f32 scratch
    # accumulator, bf16 conv intermediate). Longer bf16 accumulation -> looser atol.
    run_case("k_tiled", 2, 64, 8, 8, 16, 3, 1, 1, None, k2, atol=8e-2)

    print("KERNEL_OK")
</pallas_src>

<mosaic_0001>
module attributes {stable_mosaic.version = 11 : i64} {
  func.func @_stats_only_kernel(%arg0: i32, %arg1: memref<128x36xbf16, #tpu.memory_space<vmem>>, %arg2: memref<36x128xbf16, #tpu.memory_space<vmem>>, %arg3: memref<8x128xf32, #tpu.memory_space<vmem>>) attributes {dimension_semantics = [#tpu.dimension_semantics<parallel>], iteration_bounds = array<i64: 4>, scalar_prefetch = 0 : i64, scratch_operands = 0 : i64, tpu.core_type = #tpu.core_type<tc>, window_params = [{transform_indices = @transform_0, window_bounds = array<i64: 128, 36>}, {pipeline_mode = #tpu.pipeline_mode<synchronous>, transform_indices = @transform_1, window_bounds = array<i64: 36, 128>}, {transform_indices = @transform_2, window_bounds = array<i64: 8, 128>}]} {
    %c0 = arith.constant 0 : index
    %c0_0 = arith.constant 0 : index
    %0 = vector.load %arg1[%c0, %c0_0] : memref<128x36xbf16, #tpu.memory_space<vmem>>, vector<128x36xbf16>
    %c0_1 = arith.constant 0 : index
    %c0_2 = arith.constant 0 : index
    %1 = vector.load %arg2[%c0_1, %c0_2] : memref<36x128xbf16, #tpu.memory_space<vmem>>, vector<36x128xbf16>
    %cst = arith.constant dense<0.000000e+00> : vector<128x128xf32>
    %2 = tpu.matmul %0, %1, %cst {dimension_numbers = #tpu.dot_dimension_numbers<[1], [0], [0], [1], [0, 0, 1, 1], [], []>} : vector<128x36xbf16>, vector<36x128xbf16>, vector<128x128xf32> -> vector<128x128xf32>
    %cst_3 = arith.constant 0.000000e+00 : f32
    %3 = vector.broadcast %cst_3 : f32 to vector<8x128xf32>
    %c0_4 = arith.constant 0 : index
    %c0_5 = arith.constant 0 : index
    %4 = vector.load %arg3[%c0_4, %c0_5] : memref<8x128xf32, #tpu.memory_space<vmem>>, vector<8x128xf32>
    tpu.vector_store %arg3[%c0_4, %c0_5], %3 {strides = array<i32>} : memref<8x128xf32, #tpu.memory_space<vmem>>, vector<8x128xf32>,
    %cst_6 = arith.constant dense<0.000000e+00> : vector<128xf32>
    %5 = vector.multi_reduction <add>, %2, %cst_6 [0] : vector<128x128xf32> to vector<128xf32>
    %6 = vector.shape_cast %5 : vector<128xf32> to vector<1x128xf32>
    %c0_7 = arith.constant 0 : index
    %c0_8 = arith.constant 0 : index
    %7 = vector.load %arg3[%c0_7, %c0_8] : memref<8x128xf32, #tpu.memory_space<vmem>>, vector<1x128xf32>
    tpu.vector_store %arg3[%c0_7, %c0_8], %6 {strides = array<i32>} : memref<8x128xf32, #tpu.memory_space<vmem>>, vector<1x128xf32>,
    %8 = arith.mulf %2, %2 : vector<128x128xf32>
    %cst_9 = arith.constant dense<0.000000e+00> : vector<128xf32>
    %9 = vector.multi_reduction <add>, %8, %cst_9 [0] : vector<128x128xf32> to vector<128xf32>
    %10 = vector.shape_cast %9 : vector<128xf32> to vector<1x128xf32>
    %c1 = arith.constant 1 : index
    %c0_10 = arith.constant 0 : index
    %11 = vector.load %arg3[%c1, %c0_10] : memref<8x128xf32, #tpu.memory_space<vmem>>, vector<1x128xf32>
    tpu.vector_store %arg3[%c1, %c0_10], %10 {strides = array<i32>} : memref<8x128xf32, #tpu.memory_space<vmem>>, vector<1x128xf32>,
    return
  }
  func.func @transform_0(%arg0: i32) -> (i32, i32) {
    %c0_i32 = arith.constant 0 : i32
    %c0_i32_0 = arith.constant 0 : i32
    return %arg0, %c0_i32 : i32, i32
  }
  func.func @transform_1(%arg0: i32) -> (i32, i32) {
    %c0_i32 = arith.constant 0 : i32
    %c0_i32_0 = arith.constant 0 : i32
    %c0_i32_1 = arith.constant 0 : i32
    return %c0_i32, %c0_i32_0 : i32, i32
  }
  func.func @transform_2(%arg0: i32) -> (i32, i32) {
    %c0_i32 = arith.constant 0 : i32
    %c0_i32_0 = arith.constant 0 : i32
    return %arg0, %c0_i32 : i32, i32
  }
}

</mosaic_0001>

<llo_original>
// kernel: tpu_custom_call.1
$region0: #{tpu_custom_call.1}
  #allocation0 [shape = 'u32[]', space=smem, size = 0x4, offset = 0x4, fixed_abs, tag = 'smem constant byte address 0x4 - core index']
  #allocation1 [shape = 'u32[144,128]{1,0:T(1,128)}', space=vmem, size = 0x12000, scoped, tag = 'internal scratch']
  %s0 = inlined_call_operand.vmem [shape: bf16[512,36], index: 0, kind: input, shape index: {}]
  %s1 = inlined_call_operand.vmem [shape: bf16[36,128], index: 1, kind: input, shape index: {}]
  %s2 = inlined_call_operand.hbm [shape: f32[32,128], index: 2, kind: output, shape index: {}]
  %s3 = sld [smem:[#allocation0]]
  $region41: #{tpu_custom_call.1} parent=0
    _
  %s5 = ssub.s32 1, %s3
  %s6 = scalar_select 0, %s5, %s3
  $region1: #{tpu_custom_call.1} parent=0
    #allocation2 [shape = 'u8[8192]{0}', space=vmem, size = 0x2000, scoped, tag = 'output window, operand 0']
    #allocation3 [shape = 's32[2]{0}', space=sflag, size = 0x8, scoped, tag = 'scoped memory for tpu_custom_call.1']
    %7 = vsyncpa [#allocation3], 0
    %s8 = scalar_lea.sflag [#allocation3], 1
    %9 = vsyncpa %s8, 0
    loop: start=0, step=1, limit=6
    $region2: #{tpu_custom_call.1} parent=1 // loop_pre_header
      _
    $region3: #{tpu_custom_call.1} parent=1 // loop_header
      %s11 = sphi 0, %s15
      %p12 = scmp.ge.s32.totalorder %s11, 6
      %s21 = sphi 0, %s23
      %s24 = sphi 0, %s21
      %s25 = sphi 0, %s24
      %s41 = sphi 0, %s25
      %s45 = sphi 0, %s45
      %s47 = sphi 0, %s45
      %s48 = sphi 0, %s47
      %s62 = sphi 0, %s48
      %s68 = sphi 0, %s70
      %s71 = sphi 0, %s68
      %s72 = sphi 0, %s71
      %s88 = sphi 0, %s72
    $region4: #{tpu_custom_call.1} parent=1 // loop_header_branch
      %14 = sbr.rel (%p12) target = $region8
    $region5: #{tpu_custom_call.1} parent=1 // loop_body
      %s16 = ssub.s32 %s11, 1
      %s17 = ssub.s32 %s11, 2
      %s18 = sadd.s32 %s11, 1
      %s19 = ssub.s32 %s11, %s18
      %p20 = scmp.eq.s32.totalorder %s19, 0
      %s22 = sadd.s32 %s21, 1
      %s23 = scalar_select %p20, %s21, %s22
      %p26 = pneg %p20
      %p27 = scmp.eq.s32.totalorder %s11, 3
      %p28 = por %p26, %p27
      %p29 = scmp.ne.s32.totalorder %s21, %s24
      %p30 = scmp.eq.s32.totalorder %s11, 0
      %p31 = por %p29, %p30
      %p32 = scmp.ne.s32.totalorder %s21, %s24
      %p33 = scmp.eq.s32.totalorder %s16, 3
      %p34 = por %p32, %p33
      %p35 = scmp.ne.s32.totalorder %s24, %s25
      %p36 = scmp.eq.s32.totalorder %s16, 0
      %p37 = por %p35, %p36
      %p38 = scmp.ne.s32.totalorder %s24, %s25
      %p39 = scmp.eq.s32.totalorder %s17, 3
      %p40 = por %p38, %p39
      %p42 = scmp.ne.s32.totalorder %s25, %s41
      %p43 = scmp.eq.s32.totalorder %s17, 0
      %p44 = por %p42, %p43
      %s46 = sadd.s32 %s45, 1
      %p49 = scmp.eq.s32.totalorder %s11, 3
      %p50 = scmp.ne.s32.totalorder %s45, %s47
      %p51 = scmp.eq.s32.totalorder %s11, 0
      %p52 = por %p50, %p51
      %p53 = scmp.ne.s32.totalorder %s45, %s47
      %p54 = scmp.eq.s32.totalorder %s16, 3
      %p55 = por %p53, %p54
      %p56 = scmp.ne.s32.totalorder %s47, %s48
      %p57 = scmp.eq.s32.totalorder %s16, 0
      %p58 = por %p56, %p57
      %p59 = scmp.ne.s32.totalorder %s47, %s48
      %p60 = scmp.eq.s32.totalorder %s17, 3
      %p61 = por %p59, %p60
      %p63 = scmp.ne.s32.totalorder %s48, %s62
      %p64 = scmp.eq.s32.totalorder %s17, 0
      %p65 = por %p63, %p64
      %s66 = ssub.s32 %s11, %s18
      %p67 = scmp.eq.s32.totalorder %s66, 0
      %s69 = sadd.s32 %s68, 1
      %s70 = scalar_select %p67, %s68, %s69
      %p73 = pneg %p67
      %p74 = scmp.eq.s32.totalorder %s11, 3
      %p75 = por %p73, %p74
      %p76 = scmp.ne.s32.totalorder %s68, %s71
      %p77 = scmp.eq.s32.totalorder %s11, 0
      %p78 = por %p76, %p77
      %p79 = scmp.ne.s32.totalorder %s68, %s71
      %p80 = scmp.eq.s32.totalorder %s16, 3
      %p81 = por %p79, %p80
      %p82 = scmp.ne.s32.totalorder %s71, %s72
      %p83 = scmp.eq.s32.totalorder %s16, 0
      %p84 = por %p82, %p83
      %p85 = scmp.ne.s32.totalorder %s71, %s72
      %p86 = scmp.eq.s32.totalorder %s17, 3
      %p87 = por %p85, %p86
      %p89 = scmp.ne.s32.totalorder %s72, %s88
      %p90 = scmp.eq.s32.totalorder %s17, 0
      %p91 = por %p89, %p90
      %p92 = scmp.le.s32.totalorder 1, %s11
      %p93 = scmp.lt.s32.totalorder %s11, 5
      %p94 = pnand %p92, %p93
      %p95 = pneg %p94
      // Predicated region
      $region9: #{tpu_custom_call.1} parent=5 // pred_check
        _
      $region10: #{tpu_custom_call.1} parent=5 // pred_check_branch
        %97 = sbr.rel (%p94) target = $region12
      $region11: #{tpu_custom_call.1} parent=5 // pred_region
        %s98 = ssub.s32 %s11, 1
        // Predicated region
        $region13: #{tpu_custom_call.1} parent=11 // pred_check
          %p99 = pneg %p58
        $region14: #{tpu_custom_call.1} parent=11 // pred_check_branch
          %101 = sbr.rel (%p99) target = $region16
        $region15: #{tpu_custom_call.1} parent=11 // pred_region
          _
        $region16: #{tpu_custom_call.1} parent=11 // pred_fallthru
          _
      $region12: #{tpu_custom_call.1} parent=5 // pred_fallthru
        _
      %p102 = scmp.lt.s32.totalorder %s11, 4
      // Predicated region
      $region17: #{tpu_custom_call.1} parent=5 // pred_check
        %p103 = pneg %p102
      $region18: #{tpu_custom_call.1} parent=5 // pred_check_branch
        %105 = sbr.rel (%p103) target = $region20
      $region19: #{tpu_custom_call.1} parent=5 // pred_region
        // Predicated region
        $region21: #{tpu_custom_call.1} parent=19 // pred_check
          %p106 = pneg %p31
        $region22: #{tpu_custom_call.1} parent=19 // pred_check_branch
          %108 = sbr.rel (%p106) target = $region24
        $region23: #{tpu_custom_call.1} parent=19 // pred_region
          %s109 = smul.u32 16, %s11
          %p110 = scmp.lt.s32.totalorder %s109, 63
          %s111 = scalar_select %p110, %s109, 63
          %s112 = smul.addr %s111, 4
          %s113 = scalar_lea.vmem %s0, %s112
          %s114 = smul.u32 16, %s11
        $region24: #{tpu_custom_call.1} parent=19 // pred_fallthru
          _
      $region20: #{tpu_custom_call.1} parent=5 // pred_fallthru
        _
      %p115 = scmp.le.s32.totalorder 1, %s11
      %p116 = scmp.lt.s32.totalorder %s11, 5
      %p117 = pnand %p115, %p116
      %p118 = pneg %p117
      // Predicated region
      $region25: #{tpu_custom_call.1} parent=5 // pred_check
        _
      $region26: #{tpu_custom_call.1} parent=5 // pred_check_branch
        %120 = sbr.rel (%p117) target = $region28
      $region27: #{tpu_custom_call.1} parent=5 // pred_region
        %s121 = ssub.s32 %s11, 1
        %s122 = smul.u32 16, %s16
        %p123 = scmp.lt.s32.totalorder %s122, 63
        %s124 = scalar_select %p123, %s122, 63
        %s125 = smul.addr %s124, 4
        %s126 = scalar_lea.vmem %s0, %s125
        %p127 = pneg %p37
        %p128 = pneg %p34
        %p129 = pneg %p58
        %p130 = pneg %p55
        %p131 = pneg %p84
        %p132 = pneg %p81
        %s133 = sand.u32 %s71, 1
        %s134 = scalar_lea.sflag [#allocation3], %s133
        %s135 = sand.u32 %s71, 1
        %s136 = smul.addr %s135, 8
        %s137 = scalar_lea.vmem [#allocation2], %s136
        %s138 = smul.u32 16, %s16
        %p139 = scmp.lt.s32.totalorder %s138, 63
        %s140 = scalar_select %p139, %s138, 63
        %s141 = smul.addr %s140, 4
        %s142 = scalar_lea.vmem %s0, %s141
        %s143 = smul.u32 16, %s16
        %v145 = vld [vmem:[%s142] sm:$0xf]
        %v146 = vld [vmem:[%s142 + $0x4] sm:$0xf]
        %v147 = vld [vmem:[%s142 + $0x8] sm:$0xf]
        %v148 = vld [vmem:[%s142 + $0xc] sm:$0xf]
        %v149 = vld [vmem:[%s142 + $0x10] sm:$0xf]
        %v150 = vld [vmem:[%s142 + $0x14] sm:$0xf]
        %v151 = vld [vmem:[%s142 + $0x18] sm:$0xf]
        %v152 = vld [vmem:[%s142 + $0x1c] sm:$0xf]
        %v153 = vld [vmem:[%s142 + $0x20] sm:$0xf]
        %v154 = vld [vmem:[%s142 + $0x24] sm:$0xf]
        %v155 = vld [vmem:[%s142 + $0x28] sm:$0xf]
        %v156 = vld [vmem:[%s142 + $0x2c] sm:$0xf]
        %v157 = vld [vmem:[%s142 + $0x30] sm:$0xf]
        %v158 = vld [vmem:[%s142 + $0x34] sm:$0xf]
        %v159 = vld [vmem:[%s142 + $0x38] sm:$0xf]
        %v160 = vld [vmem:[%s142 + $0x3c] sm:$0xf]
        %v161 = vld [vmem:[%s1] sm:$0xf]
        %v162 = vld [vmem:[%s1 + $0x4] sm:$0xf]
        %v163 = vld [vmem:[%s1 + $0x8] sm:$0xf]
        %v164 = vld [vmem:[%s1 + $0xc] sm:$0xf]
        %v165 = vld [vmem:[%s1 + $0x10] sm:$0x3]
        %v182 = vunpack.c.l.b16 %v145
        %v183 = vunpack.c.l.b16 %v146
        %v184 = vunpack.c.l.b16 %v147
        %v185 = vunpack.c.l.b16 %v148
        %v186 = vunpack.c.l.b16 %v149
        %v187 = vunpack.c.l.b16 %v150
        %v188 = vunpack.c.l.b16 %v151
        %v189 = vunpack.c.l.b16 %v152
        %v190 = vunpack.c.l.b16 %v153
        %v191 = vunpack.c.l.b16 %v154
        %v192 = vunpack.c.l.b16 %v155
        %v193 = vunpack.c.l.b16 %v156
        %v194 = vunpack.c.l.b16 %v157
        %v195 = vunpack.c.l.b16 %v158
        %v196 = vunpack.c.l.b16 %v159
        %v197 = vunpack.c.l.b16 %v160
        %v198 = vpack.c.b16 %v183, %v182
        %v199 = vpack.c.b16 %v185, %v184
        %v200 = vpack.c.b16 %v187, %v186
        %v201 = vpack.c.b16 %v189, %v188
        %v202 = vpack.c.b16 %v191, %v190
        %v203 = vpack.c.b16 %v193, %v192
        %v204 = vpack.c.b16 %v195, %v194
        %v205 = vpack.c.b16 %v197, %v196
        %v211 = vunpack.c.l.b16 %v161
        %v212 = vunpack.c.l.b16 %v162
        %v213 = vunpack.c.l.b16 %v163
        %v214 = vunpack.c.l.b16 %v164
        %v215 = vunpack.c.l.b16 %v165
        %v216 = vpack.c.b16 %v212, %v211
        %v217 = vpack.c.b16 %v214, %v213
        %v218 = vpack.c.b16 %v215, %v215
        %vm221 = vcmask 293888
        %v223 = vsel %vm221, %v198, 0
        %v226 = vsel %vm221, %v199, 0
        %v229 = vsel %vm221, %v200, 0
        %v232 = vsel %vm221, %v201, 0
        %v235 = vsel %vm221, %v202, 0
        %v238 = vsel %vm221, %v203, 0
        %v241 = vsel %vm221, %v204, 0
        %v244 = vsel %vm221, %v205, 0
        %vm246 = vcmask 1041408
        %v248 = vsel %vm246, %v218, 0
        %250 = vmatprep.subr.bf16.mxu0 0
        %251 = vmatpush1.bf16.msra.mxu0 0
        %252 = vmatprep.subr.bf16.mxu0 0
        %253 = vmatpush1.bf16.msra.mxu0 0
        %254 = vmatprep.subr.bf16.mxu0 0
        %255 = vmatpush1.bf16.msra.mxu0 0
        %256 = vmatprep.subr.bf16.mxu0 0
        %257 = vmatpush1.bf16.msra.mxu0 0
        %258 = vmatprep.subr.bf16.mxu0 0
        %259 = vmatpush1.bf16.msra.mxu0 0
        %260 = vmatprep.subr.bf16.mxu0 0
        %261 = vmatpush1.bf16.msra.mxu0 %v248
        %262 = vmatprep.subr.bf16.mxu0 0
        %263 = vmatpush1.bf16.msra.mxu0 %v217
        %264 = vmatprep.subr.bf16.mxu0 0
        %265 = vmatpush1.bf16.msra.mxu0 %v216
        %266 = vmatprep.subr.bf16.mxu0 0
        %267 = vmatpush2.bf16.msra.mxu0 0
        %268 = vmatprep.subr.bf16.mxu0 0
        %269 = vmatpush2.bf16.msra.mxu0 0
        %270 = vmatprep.subr.bf16.mxu0 0
        %271 = vmatpush2.bf16.msra.mxu0 0
        %272 = vmatprep.subr.bf16.mxu0 0
        %273 = vmatpush2.bf16.msra.mxu0 0
        %274 = vmatprep.subr.bf16.mxu0 0
        %275 = vmatpush2.bf16.msra.mxu0 0
        %276 = vmatprep.subr.bf16.mxu0 0
        %277 = vmatpush2.bf16.msra.mxu0 0
        %278 = vmatprep.subr.bf16.mxu0 0
        %279 = vmatpush2.bf16.msra.mxu0 0
        %280 = vmatprep.subr.bf16.mxu0 0
        %281 = vmatpush2.bf16.msra.mxu0 0
        %282 = vmatprep.mubr.bf16.mxu0 0
        %283 = vmatmul.mubr.bf16.gmra.mxu0 %v223
        %v284 = vpop.f32.mrf.mxu0
        %v285 = vadd.f32 0.0, %v284
        %v286 = vpop.f32.mrf.mxu0
        %v287 = vpop.f32.mrf.mxu0
        %v288 = vadd.f32 0.0, %v287
        %v289 = vpop.f32.mrf.mxu0
        %290 = vmatprep.mubr.bf16.mxu0 0
        %291 = vmatmul.mubr.bf16.gmra.mxu0 %v226
        %v292 = vpop.f32.mrf.mxu0
        %v293 = vadd.f32 0.0, %v292
        %v294 = vpop.f32.mrf.mxu0
        %v295 = vpop.f32.mrf.mxu0
        %v296 = vadd.f32 0.0, %v295
        %v297 = vpop.f32.mrf.mxu0
        %298 = vmatprep.mubr.bf16.mxu0 0
        %299 = vmatmul.mubr.bf16.gmra.mxu0 %v229
        %v300 = vpop.f32.mrf.mxu0
        %v301 = vadd.f32 0.0, %v300
        %v302 = vpop.f32.mrf.mxu0
        %v303 = vpop.f32.mrf.mxu0
        %v304 = vadd.f32 0.0, %v303
        %v305 = vpop.f32.mrf.mxu0
        %306 = vmatprep.mubr.bf16.mxu0 0
        %307 = vmatmul.mubr.bf16.gmra.mxu0 %v232
        %v308 = vpop.f32.mrf.mxu0
        %v309 = vadd.f32 0.0, %v308
        %v310 = vpop.f32.mrf.mxu0
        %v311 = vpop.f32.mrf.mxu0
        %v312 = vadd.f32 0.0, %v311
        %v313 = vpop.f32.mrf.mxu0
        %314 = vmatprep.mubr.bf16.mxu0 0
        %315 = vmatmul.mubr.bf16.gmra.mxu0 %v235
        %v316 = vpop.f32.mrf.mxu0
        %v317 = vadd.f32 0.0, %v316
        %v318 = vpop.f32.mrf.mxu0
        %v319 = vpop.f32.mrf.mxu0
        %v320 = vadd.f32 0.0, %v319
        %v321 = vpop.f32.mrf.mxu0
        %322 = vmatprep.mubr.bf16.mxu0 0
        %323 = vmatmul.mubr.bf16.gmra.mxu0 %v238
        %v324 = vpop.f32.mrf.mxu0
        %v325 = vadd.f32 0.0, %v324
        %v326 = vpop.f32.mrf.mxu0
        %v327 = vpop.f32.mrf.mxu0
        %v328 = vadd.f32 0.0, %v327
        %v329 = vpop.f32.mrf.mxu0
        %330 = vmatprep.mubr.bf16.mxu0 0
        %331 = vmatmul.mubr.bf16.gmra.mxu0 %v241
        %v332 = vpop.f32.mrf.mxu0
        %v333 = vadd.f32 0.0, %v332
        %v334 = vpop.f32.mrf.mxu0
        %v335 = vpop.f32.mrf.mxu0
        %v336 = vadd.f32 0.0, %v335
        %v337 = vpop.f32.mrf.mxu0
        %338 = vmatprep.mubr.bf16.mxu0 0
        %339 = vmatmul.mubr.bf16.gmra.mxu0 %v244
        %v340 = vpop.f32.mrf.mxu0
        %v341 = vadd.f32 0.0, %v340
        %v342 = vpop.f32.mrf.mxu0
        %v343 = vpop.f32.mrf.mxu0
        %v344 = vadd.f32 0.0, %v343
        %v345 = vpop.f32.mrf.mxu0
        %346 = vdwg.mxu0
        %347 = vst [vmem:[%s137] sm:$0xff] 0.0
        %v348 = vadd.f32 %v285, %v288
        %v349 = vadd.f32 %v348, %v293
        %v350 = vadd.f32 %v349, %v296
        %v351 = vadd.f32 %v350, %v301
        %v352 = vadd.f32 %v351, %v304
        %v353 = vadd.f32 %v352, %v309
        %v354 = vadd.f32 %v353, %v312
        %v355 = vadd.f32 %v354, %v317
        %v356 = vadd.f32 %v355, %v320
        %v357 = vadd.f32 %v356, %v325
        %v358 = vadd.f32 %v357, %v328
        %v359 = vadd.f32 %v358, %v333
        %v360 = vadd.f32 %v359, %v336
        %v361 = vadd.f32 %v360, %v341
        %v362 = vadd.f32 %v361, %v344
        %v363 = vrot.slane %v362, 4
        %v364 = vadd.f32 %v362, %v363
        %v365 = vrot.slane %v364, 2
        %v366 = vadd.f32 %v364, %v365
        %v367 = vrot.slane %v366, 1
        %v368 = vadd.f32 %v366, %v367
        %369 = vst [vmem:[%s137] sm:$0x1] %v368
        %v370 = vmul.f32 %v285, %v285
        %v371 = vmul.f32 %v288, %v288
        %v372 = vmul.f32 %v293, %v293
        %v373 = vmul.f32 %v296, %v296
        %v374 = vmul.f32 %v301, %v301
        %v375 = vmul.f32 %v304, %v304
        %v376 = vmul.f32 %v309, %v309
        %v377 = vmul.f32 %v312, %v312
        %v378 = vmul.f32 %v317, %v317
        %v379 = vmul.f32 %v320, %v320
        %v380 = vmul.f32 %v325, %v325
        %v381 = vmul.f32 %v328, %v328
        %v382 = vmul.f32 %v333, %v333
        %v383 = vmul.f32 %v336, %v336
        %v384 = vmul.f32 %v341, %v341
        %v385 = vmul.f32 %v344, %v344
        %v386 = vadd.f32 %v370, %v371
        %v387 = vadd.f32 %v386, %v372
        %v388 = vadd.f32 %v387, %v373
        %v389 = vadd.f32 %v388, %v374
        %v390 = vadd.f32 %v389, %v375
        %v391 = vadd.f32 %v390, %v376
        %v392 = vadd.f32 %v391, %v377
        %v393 = vadd.f32 %v392, %v378
        %v394 = vadd.f32 %v393, %v379
        %v395 = vadd.f32 %v394, %v380
        %v396 = vadd.f32 %v395, %v381
        %v397 = vadd.f32 %v396, %v382
        %v398 = vadd.f32 %v397, %v383
        %v399 = vadd.f32 %v398, %v384
        %v400 = vadd.f32 %v399, %v385
        %v401 = vrot.slane %v400, 4
        %v402 = vadd.f32 %v400, %v401
        %v403 = vrot.slane %v402, 2
        %v404 = vadd.f32 %v402, %v403
        %v405 = vrot.slane %v404, 1
        %v406 = vadd.f32 %v404, %v405
        %407 = vst [vmem:[%s137 + $0x1] sm:$0x1] %v406
        %s408 = sand.u32 %s71, 1
        %s409 = scalar_lea.sflag [#allocation3], %s408
        %s410 = sand.u32 %s71, 1
        %s411 = smul.addr %s410, 8
        %s412 = scalar_lea.vmem [#allocation2], %s411
        // Predicated region
        $region29: #{tpu_custom_call.1} parent=27 // pred_check
          %p413 = pneg %p81
        $region30: #{tpu_custom_call.1} parent=27 // pred_check_branch
          %415 = sbr.rel (%p413) target = $region32
        $region31: #{tpu_custom_call.1} parent=27 // pred_region
          %s417 = ssub.s32 128, 128
          %418 = vsyncadd %s409, %s417
          %s419 = smul.addr %s16, 128
          %s420 = scalar_lea.hbm %s2, %s419
          %s422 = sshll.u32 %s412, 4
          %s423 = int_to_ptr.vmem [resolvable:$true] %s422
          %425 = dma.vmem_to_hbm [thread:$0]  %s423, 128, %s420, %s409
        $region32: #{tpu_custom_call.1} parent=27 // pred_fallthru
          _
      $region28: #{tpu_custom_call.1} parent=5 // pred_fallthru
        _
      %p426 = scmp.le.s32.totalorder 2, %s11
      // Predicated region
      $region33: #{tpu_custom_call.1} parent=5 // pred_check
        %p427 = pneg %p426
      $region34: #{tpu_custom_call.1} parent=5 // pred_check_branch
        %429 = sbr.rel (%p427) target = $region36
      $region35: #{tpu_custom_call.1} parent=5 // pred_region
        %s430 = ssub.s32 %s11, 2
        // Predicated region
        $region37: #{tpu_custom_call.1} parent=35 // pred_check
          %p431 = pneg %p87
        $region38: #{tpu_custom_call.1} parent=35 // pred_check_branch
          %433 = sbr.rel (%p431) target = $region40
        $region39: #{tpu_custom_call.1} parent=35 // pred_region
          %s434 = sand.u32 %s72, 1
          %s435 = scalar_lea.sflag [#allocation3], %s434
          %s436 = sand.u32 %s72, 1
          %s437 = smul.addr %s436, 8
          %s438 = scalar_lea.vmem [#allocation2], %s437
          %439 = dma.done %s435, 128
        $region40: #{tpu_custom_call.1} parent=35 // pred_fallthru
          _
      $region36: #{tpu_custom_call.1} parent=5 // pred_fallthru
        _
    $region6: #{tpu_custom_call.1} parent=1 // loop_footer
      %s15 = sadd.s32 1, %s11
    $region7: #{tpu_custom_call.1} parent=1 // loop_footer_branch
      %10 = sbr.rel target = $region3
    $region8: #{tpu_custom_call.1} parent=1 // loop_exit
      _
    %440 = vsyncpa [#allocation3], 1
    %s441 = scalar_lea.sflag [#allocation3], 1
    %442 = vsyncpa %s441, 1

</llo_original>
